<compile_context>
chip_gen: v6e
topology: v6e:2x2x1
jax: 0.10.0
libtpu: 0.0.40
codegen_flags: <defaults>
</compile_context>

<pallas_src>
import jax
import jax.numpy as jnp
from jax import lax
from jax.experimental import pallas as pl
from jax.experimental.pallas import tpu as pltpu

SUB = 8        # sublanes per vreg
LANES = 128    # lanes per vreg (batch lives here)
IN_F, HID, OUT_F = 3, 11, 3


def simple_nn_kernel(x_ref, w1_ref, b1_ref, w2_ref, b2_ref, o_ref):
    # x_ref / o_ref: (3, TM, 128) VMEM tiles (feature/class rows, batch on sublane*lane).
    # w1_ref (33,), b1_ref (11,), w2_ref (33,), b2_ref (3,): flat f32 scalars in SMEM.
    # Hoist all 80 scalar reads out of the chunk loop (cheap sld, 2 scalar slots/cycle).
    w1s = [[w1_ref[k * HID + j] for j in range(HID)] for k in range(IN_F)]
    b1s = [b1_ref[j] for j in range(HID)]
    w2s = [[w2_ref[j * OUT_F + i] for i in range(OUT_F)] for j in range(HID)]
    b2s = [b2_ref[i] for i in range(OUT_F)]

    n_chunks = x_ref.shape[1] // SUB  # static

    def chunk(c, carry):
        r = pl.multiple_of(c * SUB, SUB)
        rows = pl.ds(r, SUB)
        x = [x_ref[k, rows, :] for k in range(IN_F)]       # 3 x (8,128) full vregs

        # ---- Layer 1: h_j = relu(sum_k x_k * w1[k,j] + b1[j])   (scalar*vector VPU MACs)
        h = []
        for j in range(HID):
            acc = x[0] * w1s[0][j] + b1s[j]
            acc = acc + x[1] * w1s[1][j]
            acc = acc + x[2] * w1s[2][j]
            h.append(jnp.maximum(acc, 0.0))

        # ---- Layer 2: logits_i = sum_j h_j * w2[j,i] + b2[i]
        logits = []
        for i in range(OUT_F):
            acc = h[0] * w2s[0][i] + b2s[i]
            for j in range(1, HID):
                acc = acc + h[j] * w2s[j][i]
            logits.append(acc)

        # ---- Softmax over the 3 class rows (dim=1 of the original layout).
        m = jnp.maximum(jnp.maximum(logits[0], logits[1]), logits[2])
        e = [jnp.exp(l - m) for l in logits]                 # only 3 rows hit the EUP
        inv = 1.0 / (e[0] + e[1] + e[2])                     # exact: rows sum to 1 (f32)
        for i in range(OUT_F):
            o_ref[i, rows, :] = (e[i] * inv).astype(o_ref.dtype)
        return carry

    lax.fori_loop(0, n_chunks, chunk, None)


def _round_up(n, m):
    return ((n + m - 1) // m) * m


def simple_nn_forward(x, w1, b1, w2, b2, *, tm=512):
    """x: (B, 3) f32; w1: (3, 11); b1: (11,); w2: (11, 3); b2: (3,). Returns (B, 3) f32."""
    B = x.shape[0]

    # Rows of 128 samples; pad row count to a multiple of 8 (sublane tile), then to the
    # batch-tile size TM so the grid divides evenly.
    m_min = _round_up(pl.cdiv(B, LANES), SUB)
    TM = max(SUB, (min(int(tm), m_min) // SUB) * SUB)
    M = _round_up(m_min, TM)
    B_pad = M * LANES

    # Feature-major staging: only real bytes (12 B/sample) are transposed/reshaped here.
    xp = jnp.pad(x.astype(jnp.float32), ((0, B_pad - B), (0, 0)))   # (B_pad, 3)
    x_maj = xp.T.reshape(IN_F, M, LANES)                            # (3, M, 128)

    # Flat f32 parameter tables for SMEM (80 scalars total).
    w1f = jnp.asarray(w1, jnp.float32).reshape(-1)   # (33,)  index k*11 + j
    b1f = jnp.asarray(b1, jnp.float32).reshape(-1)   # (11,)
    w2f = jnp.asarray(w2, jnp.float32).reshape(-1)   # (33,)  index j*3 + i
    b2f = jnp.asarray(b2, jnp.float32).reshape(-1)   # (3,)

    smem = pl.BlockSpec(memory_space=pltpu.MemorySpace.SMEM)

    # VMEM budget: 2 (in+out) x 2 (double buffer) x 3*TM*128*4 B = 6144*TM B
    # -> ~3 MiB at TM=512: safe on every generation (incl. v7x's 64 MiB physical VMEM).
    out_maj = pl.pallas_call(
        simple_nn_kernel,
        out_shape=jax.ShapeDtypeStruct((OUT_F, M, LANES), jnp.float32),
        grid=(M // TM,),
        in_specs=[
            pl.BlockSpec((IN_F, TM, LANES), lambda i: (0, i, 0)),   # x: tiled along batch rows
            smem,                                                    # w1 (scalars)
            smem,                                                    # b1
            smem,                                                    # w2
            smem,                                                    # b2
        ],
        out_specs=pl.BlockSpec((OUT_F, TM, LANES), lambda i: (0, i, 0)),
        compiler_params=pltpu.CompilerParams(
            # Independent batch tiles. TODO(synk): on v7x, verify 2-TC sharding in a
            # trace and consider pltpu.CORE_PARALLEL if the kernel is not HBM-bound.
            dimension_semantics=("parallel",)),
    )(x_maj, w1f, b1f, w2f, b2f)

    # Undo the feature-major staging (again only 12 B/sample of real data).
    return out_maj.reshape(OUT_F, B_pad).T[:B]


def init_params(key):
    # Deterministic init mirroring PyTorch nn.Linear default:
    # uniform(-1/sqrt(fan_in), 1/sqrt(fan_in)) for both weight and bias.
    k1, k2, k3, k4 = jax.random.split(key, 4)
    bound1 = 1.0 / jnp.sqrt(3.0)
    bound2 = 1.0 / jnp.sqrt(11.0)
    w1 = jax.random.uniform(k1, (3, 11), jnp.float32, -bound1, bound1)   # (in, out)
    b1 = jax.random.uniform(k2, (11,), jnp.float32, -bound1, bound1)
    w2 = jax.random.uniform(k3, (11, 3), jnp.float32, -bound2, bound2)   # (in, out)
    b2 = jax.random.uniform(k4, (3,), jnp.float32, -bound2, bound2)
    return w1, b1, w2, b2


def _reference(x, w1, b1, w2, b2):
    h = jnp.maximum(x @ w1 + b1, 0.0)
    return jax.nn.softmax(h @ w2 + b2, axis=1)


if __name__ == "__main__":
    key = jax.random.PRNGKey(0)
    kx, kp = jax.random.split(key)
    w1, b1, w2, b2 = init_params(kp)

    # Small batch: single grid step, single inner chunk.
    batch = 8
    x = jax.random.normal(kx, (batch, 3), dtype=jnp.float32)
    out = jax.block_until_ready(simple_nn_forward(x, w1, b1, w2, b2))
    ref = _reference(x, w1, b1, w2, b2)
    assert out.shape == (batch, 3)
    assert jnp.allclose(out, ref, atol=1e-3, rtol=1e-3)
    assert jnp.allclose(jnp.sum(out, axis=1), 1.0, atol=1e-3)

    # Larger, non-multiple batch.
    batch2 = 2000
    x2 = jax.random.normal(jax.random.PRNGKey(1), (batch2, 3), dtype=jnp.float32)
    ref2 = _reference(x2, w1, b1, w2, b2)

    # Default tile: single grid step, multiple inner 8-row chunks.
    out2 = jax.block_until_ready(simple_nn_forward(x2, w1, b1, w2, b2))
    assert out2.shape == (batch2, 3)
    assert jnp.allclose(out2, ref2, atol=1e-3, rtol=1e-3)

    # Tiny tile: multiple grid steps (exercises the parallel batch grid axis).
    out3 = jax.block_until_ready(simple_nn_forward(x2, w1, b1, w2, b2, tm=8))
    assert jnp.allclose(out3, ref2, atol=1e-3, rtol=1e-3)

    print("KERNEL_OK")
</pallas_src>

<mosaic_0001>
module attributes {stable_mosaic.version = 11 : i64} {
  func.func @simple_nn_kernel(%arg0: i32, %arg1: memref<3x8x128xf32, #tpu.memory_space<vmem>>, %arg2: memref<33xf32, #tpu.memory_space<smem>>, %arg3: memref<11xf32, #tpu.memory_space<smem>>, %arg4: memref<33xf32, #tpu.memory_space<smem>>, %arg5: memref<3xf32, #tpu.memory_space<smem>>, %arg6: memref<3x8x128xf32, #tpu.memory_space<vmem>>) attributes {dimension_semantics = [#tpu.dimension_semantics<parallel>], iteration_bounds = array<i64: 1>, scalar_prefetch = 0 : i64, scratch_operands = 0 : i64, tpu.core_type = #tpu.core_type<tc>, window_params = [{transform_indices = @transform_0, window_bounds = array<i64: 3, 8, 128>}, {transform_indices = @transform_1, window_bounds = array<i64: 33>}, {transform_indices = @transform_2, window_bounds = array<i64: 11>}, {transform_indices = @transform_3, window_bounds = array<i64: 33>}, {transform_indices = @transform_4, window_bounds = array<i64: 3>}, {transform_indices = @transform_5, window_bounds = array<i64: 3, 8, 128>}]} {
    %c0 = arith.constant 0 : index
    %0 = memref.load %arg2[%c0] : memref<33xf32, #tpu.memory_space<smem>>
    %c1 = arith.constant 1 : index
    %1 = memref.load %arg2[%c1] : memref<33xf32, #tpu.memory_space<smem>>
    %c2 = arith.constant 2 : index
    %2 = memref.load %arg2[%c2] : memref<33xf32, #tpu.memory_space<smem>>
    %c3 = arith.constant 3 : index
    %3 = memref.load %arg2[%c3] : memref<33xf32, #tpu.memory_space<smem>>
    %c4 = arith.constant 4 : index
    %4 = memref.load %arg2[%c4] : memref<33xf32, #tpu.memory_space<smem>>
    %c5 = arith.constant 5 : index
    %5 = memref.load %arg2[%c5] : memref<33xf32, #tpu.memory_space<smem>>
    %c6 = arith.constant 6 : index
    %6 = memref.load %arg2[%c6] : memref<33xf32, #tpu.memory_space<smem>>
    %c7 = arith.constant 7 : index
    %7 = memref.load %arg2[%c7] : memref<33xf32, #tpu.memory_space<smem>>
    %c8 = arith.constant 8 : index
    %8 = memref.load %arg2[%c8] : memref<33xf32, #tpu.memory_space<smem>>
    %c9 = arith.constant 9 : index
    %9 = memref.load %arg2[%c9] : memref<33xf32, #tpu.memory_space<smem>>
    %c10 = arith.constant 10 : index
    %10 = memref.load %arg2[%c10] : memref<33xf32, #tpu.memory_space<smem>>
    %c11 = arith.constant 11 : index
    %11 = memref.load %arg2[%c11] : memref<33xf32, #tpu.memory_space<smem>>
    %c12 = arith.constant 12 : index
    %12 = memref.load %arg2[%c12] : memref<33xf32, #tpu.memory_space<smem>>
    %c13 = arith.constant 13 : index
    %13 = memref.load %arg2[%c13] : memref<33xf32, #tpu.memory_space<smem>>
    %c14 = arith.constant 14 : index
    %14 = memref.load %arg2[%c14] : memref<33xf32, #tpu.memory_space<smem>>
    %c15 = arith.constant 15 : index
    %15 = memref.load %arg2[%c15] : memref<33xf32, #tpu.memory_space<smem>>
    %c16 = arith.constant 16 : index
    %16 = memref.load %arg2[%c16] : memref<33xf32, #tpu.memory_space<smem>>
    %c17 = arith.constant 17 : index
    %17 = memref.load %arg2[%c17] : memref<33xf32, #tpu.memory_space<smem>>
    %c18 = arith.constant 18 : index
    %18 = memref.load %arg2[%c18] : memref<33xf32, #tpu.memory_space<smem>>
    %c19 = arith.constant 19 : index
    %19 = memref.load %arg2[%c19] : memref<33xf32, #tpu.memory_space<smem>>
    %c20 = arith.constant 20 : index
    %20 = memref.load %arg2[%c20] : memref<33xf32, #tpu.memory_space<smem>>
    %c21 = arith.constant 21 : index
    %21 = memref.load %arg2[%c21] : memref<33xf32, #tpu.memory_space<smem>>
    %c22 = arith.constant 22 : index
    %22 = memref.load %arg2[%c22] : memref<33xf32, #tpu.memory_space<smem>>
    %c23 = arith.constant 23 : index
    %23 = memref.load %arg2[%c23] : memref<33xf32, #tpu.memory_space<smem>>
    %c24 = arith.constant 24 : index
    %24 = memref.load %arg2[%c24] : memref<33xf32, #tpu.memory_space<smem>>
    %c25 = arith.constant 25 : index
    %25 = memref.load %arg2[%c25] : memref<33xf32, #tpu.memory_space<smem>>
    %c26 = arith.constant 26 : index
    %26 = memref.load %arg2[%c26] : memref<33xf32, #tpu.memory_space<smem>>
    %c27 = arith.constant 27 : index
    %27 = memref.load %arg2[%c27] : memref<33xf32, #tpu.memory_space<smem>>
    %c28 = arith.constant 28 : index
    %28 = memref.load %arg2[%c28] : memref<33xf32, #tpu.memory_space<smem>>
    %c29 = arith.constant 29 : index
    %29 = memref.load %arg2[%c29] : memref<33xf32, #tpu.memory_space<smem>>
    %c30 = arith.constant 30 : index
    %30 = memref.load %arg2[%c30] : memref<33xf32, #tpu.memory_space<smem>>
    %c31 = arith.constant 31 : index
    %31 = memref.load %arg2[%c31] : memref<33xf32, #tpu.memory_space<smem>>
    %c32 = arith.constant 32 : index
    %32 = memref.load %arg2[%c32] : memref<33xf32, #tpu.memory_space<smem>>
    %c0_0 = arith.constant 0 : index
    %33 = memref.load %arg3[%c0_0] : memref<11xf32, #tpu.memory_space<smem>>
    %c1_1 = arith.constant 1 : index
    %34 = memref.load %arg3[%c1_1] : memref<11xf32, #tpu.memory_space<smem>>
    %c2_2 = arith.constant 2 : index
    %35 = memref.load %arg3[%c2_2] : memref<11xf32, #tpu.memory_space<smem>>
    %c3_3 = arith.constant 3 : index
    %36 = memref.load %arg3[%c3_3] : memref<11xf32, #tpu.memory_space<smem>>
    %c4_4 = arith.constant 4 : index
    %37 = memref.load %arg3[%c4_4] : memref<11xf32, #tpu.memory_space<smem>>
    %c5_5 = arith.constant 5 : index
    %38 = memref.load %arg3[%c5_5] : memref<11xf32, #tpu.memory_space<smem>>
    %c6_6 = arith.constant 6 : index
    %39 = memref.load %arg3[%c6_6] : memref<11xf32, #tpu.memory_space<smem>>
    %c7_7 = arith.constant 7 : index
    %40 = memref.load %arg3[%c7_7] : memref<11xf32, #tpu.memory_space<smem>>
    %c8_8 = arith.constant 8 : index
    %41 = memref.load %arg3[%c8_8] : memref<11xf32, #tpu.memory_space<smem>>
    %c9_9 = arith.constant 9 : index
    %42 = memref.load %arg3[%c9_9] : memref<11xf32, #tpu.memory_space<smem>>
    %c10_10 = arith.constant 10 : index
    %43 = memref.load %arg3[%c10_10] : memref<11xf32, #tpu.memory_space<smem>>
    %c0_11 = arith.constant 0 : index
    %44 = memref.load %arg4[%c0_11] : memref<33xf32, #tpu.memory_space<smem>>
    %c1_12 = arith.constant 1 : index
    %45 = memref.load %arg4[%c1_12] : memref<33xf32, #tpu.memory_space<smem>>
    %c2_13 = arith.constant 2 : index
    %46 = memref.load %arg4[%c2_13] : memref<33xf32, #tpu.memory_space<smem>>
    %c3_14 = arith.constant 3 : index
    %47 = memref.load %arg4[%c3_14] : memref<33xf32, #tpu.memory_space<smem>>
    %c4_15 = arith.constant 4 : index
    %48 = memref.load %arg4[%c4_15] : memref<33xf32, #tpu.memory_space<smem>>
    %c5_16 = arith.constant 5 : index
    %49 = memref.load %arg4[%c5_16] : memref<33xf32, #tpu.memory_space<smem>>
    %c6_17 = arith.constant 6 : index
    %50 = memref.load %arg4[%c6_17] : memref<33xf32, #tpu.memory_space<smem>>
    %c7_18 = arith.constant 7 : index
    %51 = memref.load %arg4[%c7_18] : memref<33xf32, #tpu.memory_space<smem>>
    %c8_19 = arith.constant 8 : index
    %52 = memref.load %arg4[%c8_19] : memref<33xf32, #tpu.memory_space<smem>>
    %c9_20 = arith.constant 9 : index
    %53 = memref.load %arg4[%c9_20] : memref<33xf32, #tpu.memory_space<smem>>
    %c10_21 = arith.constant 10 : index
    %54 = memref.load %arg4[%c10_21] : memref<33xf32, #tpu.memory_space<smem>>
    %c11_22 = arith.constant 11 : index
    %55 = memref.load %arg4[%c11_22] : memref<33xf32, #tpu.memory_space<smem>>
    %c12_23 = arith.constant 12 : index
    %56 = memref.load %arg4[%c12_23] : memref<33xf32, #tpu.memory_space<smem>>
    %c13_24 = arith.constant 13 : index
    %57 = memref.load %arg4[%c13_24] : memref<33xf32, #tpu.memory_space<smem>>
    %c14_25 = arith.constant 14 : index
    %58 = memref.load %arg4[%c14_25] : memref<33xf32, #tpu.memory_space<smem>>
    %c15_26 = arith.constant 15 : index
    %59 = memref.load %arg4[%c15_26] : memref<33xf32, #tpu.memory_space<smem>>
    %c16_27 = arith.constant 16 : index
    %60 = memref.load %arg4[%c16_27] : memref<33xf32, #tpu.memory_space<smem>>
    %c17_28 = arith.constant 17 : index
    %61 = memref.load %arg4[%c17_28] : memref<33xf32, #tpu.memory_space<smem>>
    %c18_29 = arith.constant 18 : index
    %62 = memref.load %arg4[%c18_29] : memref<33xf32, #tpu.memory_space<smem>>
    %c19_30 = arith.constant 19 : index
    %63 = memref.load %arg4[%c19_30] : memref<33xf32, #tpu.memory_space<smem>>
    %c20_31 = arith.constant 20 : index
    %64 = memref.load %arg4[%c20_31] : memref<33xf32, #tpu.memory_space<smem>>
    %c21_32 = arith.constant 21 : index
    %65 = memref.load %arg4[%c21_32] : memref<33xf32, #tpu.memory_space<smem>>
    %c22_33 = arith.constant 22 : index
    %66 = memref.load %arg4[%c22_33] : memref<33xf32, #tpu.memory_space<smem>>
    %c23_34 = arith.constant 23 : index
    %67 = memref.load %arg4[%c23_34] : memref<33xf32, #tpu.memory_space<smem>>
    %c24_35 = arith.constant 24 : index
    %68 = memref.load %arg4[%c24_35] : memref<33xf32, #tpu.memory_space<smem>>
    %c25_36 = arith.constant 25 : index
    %69 = memref.load %arg4[%c25_36] : memref<33xf32, #tpu.memory_space<smem>>
    %c26_37 = arith.constant 26 : index
    %70 = memref.load %arg4[%c26_37] : memref<33xf32, #tpu.memory_space<smem>>
    %c27_38 = arith.constant 27 : index
    %71 = memref.load %arg4[%c27_38] : memref<33xf32, #tpu.memory_space<smem>>
    %c28_39 = arith.constant 28 : index
    %72 = memref.load %arg4[%c28_39] : memref<33xf32, #tpu.memory_space<smem>>
    %c29_40 = arith.constant 29 : index
    %73 = memref.load %arg4[%c29_40] : memref<33xf32, #tpu.memory_space<smem>>
    %c30_41 = arith.constant 30 : index
    %74 = memref.load %arg4[%c30_41] : memref<33xf32, #tpu.memory_space<smem>>
    %c31_42 = arith.constant 31 : index
    %75 = memref.load %arg4[%c31_42] : memref<33xf32, #tpu.memory_space<smem>>
    %c32_43 = arith.constant 32 : index
    %76 = memref.load %arg4[%c32_43] : memref<33xf32, #tpu.memory_space<smem>>
    %c0_44 = arith.constant 0 : index
    %77 = memref.load %arg5[%c0_44] : memref<3xf32, #tpu.memory_space<smem>>
    %c1_45 = arith.constant 1 : index
    %78 = memref.load %arg5[%c1_45] : memref<3xf32, #tpu.memory_space<smem>>
    %c2_46 = arith.constant 2 : index
    %79 = memref.load %arg5[%c2_46] : memref<3xf32, #tpu.memory_space<smem>>
    %c0_i32 = arith.constant 0 : i32
    %c8_i32 = arith.constant 8 : i32
    %80 = arith.muli %c0_i32, %c8_i32 : i32
    %81 = tpu.assume_multiple %80, 8 : i32
    %c0_47 = arith.constant 0 : index
    %82 = arith.index_cast %81 : i32 to index
    %c0_48 = arith.constant 0 : index
    %83 = vector.load %arg1[%c0_47, %82, %c0_48] : memref<3x8x128xf32, #tpu.memory_space<vmem>>, vector<1x8x128xf32>
    %84 = vector.shape_cast %83 : vector<1x8x128xf32> to vector<8x128xf32>
    %c1_49 = arith.constant 1 : index
    %85 = arith.index_cast %81 : i32 to index
    %c0_50 = arith.constant 0 : index
    %86 = vector.load %arg1[%c1_49, %85, %c0_50] : memref<3x8x128xf32, #tpu.memory_space<vmem>>, vector<1x8x128xf32>
    %87 = vector.shape_cast %86 : vector<1x8x128xf32> to vector<8x128xf32>
    %c2_51 = arith.constant 2 : index
    %88 = arith.index_cast %81 : i32 to index
    %c0_52 = arith.constant 0 : index
    %89 = vector.load %arg1[%c2_51, %88, %c0_52] : memref<3x8x128xf32, #tpu.memory_space<vmem>>, vector<1x8x128xf32>
    %90 = vector.shape_cast %89 : vector<1x8x128xf32> to vector<8x128xf32>
    %91 = vector.broadcast %0 : f32 to vector<8x128xf32>
    %92 = arith.mulf %84, %91 : vector<8x128xf32>
    %93 = vector.broadcast %33 : f32 to vector<8x128xf32>
    %94 = arith.addf %92, %93 : vector<8x128xf32>
    %95 = vector.broadcast %11 : f32 to vector<8x128xf32>
    %96 = arith.mulf %87, %95 : vector<8x128xf32>
    %97 = arith.addf %94, %96 : vector<8x128xf32>
    %98 = vector.broadcast %22 : f32 to vector<8x128xf32>
    %99 = arith.mulf %90, %98 : vector<8x128xf32>
    %100 = arith.addf %97, %99 : vector<8x128xf32>
    %cst = arith.constant 0.000000e+00 : f32
    %101 = vector.broadcast %cst : f32 to vector<8x128xf32>
    %102 = arith.maximumf %100, %101 : vector<8x128xf32>
    %103 = vector.broadcast %1 : f32 to vector<8x128xf32>
    %104 = arith.mulf %84, %103 : vector<8x128xf32>
    %105 = vector.broadcast %34 : f32 to vector<8x128xf32>
    %106 = arith.addf %104, %105 : vector<8x128xf32>
    %107 = vector.broadcast %12 : f32 to vector<8x128xf32>
    %108 = arith.mulf %87, %107 : vector<8x128xf32>
    %109 = arith.addf %106, %108 : vector<8x128xf32>
    %110 = vector.broadcast %23 : f32 to vector<8x128xf32>
    %111 = arith.mulf %90, %110 : vector<8x128xf32>
    %112 = arith.addf %109, %111 : vector<8x128xf32>
    %cst_53 = arith.constant 0.000000e+00 : f32
    %113 = vector.broadcast %cst_53 : f32 to vector<8x128xf32>
    %114 = arith.maximumf %112, %113 : vector<8x128xf32>
    %115 = vector.broadcast %2 : f32 to vector<8x128xf32>
    %116 = arith.mulf %84, %115 : vector<8x128xf32>
    %117 = vector.broadcast %35 : f32 to vector<8x128xf32>
    %118 = arith.addf %116, %117 : vector<8x128xf32>
    %119 = vector.broadcast %13 : f32 to vector<8x128xf32>
    %120 = arith.mulf %87, %119 : vector<8x128xf32>
    %121 = arith.addf %118, %120 : vector<8x128xf32>
    %122 = vector.broadcast %24 : f32 to vector<8x128xf32>
    %123 = arith.mulf %90, %122 : vector<8x128xf32>
    %124 = arith.addf %121, %123 : vector<8x128xf32>
    %cst_54 = arith.constant 0.000000e+00 : f32
    %125 = vector.broadcast %cst_54 : f32 to vector<8x128xf32>
    %126 = arith.maximumf %124, %125 : vector<8x128xf32>
    %127 = vector.broadcast %3 : f32 to vector<8x128xf32>
    %128 = arith.mulf %84, %127 : vector<8x128xf32>
    %129 = vector.broadcast %36 : f32 to vector<8x128xf32>
    %130 = arith.addf %128, %129 : vector<8x128xf32>
    %131 = vector.broadcast %14 : f32 to vector<8x128xf32>
    %132 = arith.mulf %87, %131 : vector<8x128xf32>
    %133 = arith.addf %130, %132 : vector<8x128xf32>
    %134 = vector.broadcast %25 : f32 to vector<8x128xf32>
    %135 = arith.mulf %90, %134 : vector<8x128xf32>
    %136 = arith.addf %133, %135 : vector<8x128xf32>
    %cst_55 = arith.constant 0.000000e+00 : f32
    %137 = vector.broadcast %cst_55 : f32 to vector<8x128xf32>
    %138 = arith.maximumf %136, %137 : vector<8x128xf32>
    %139 = vector.broadcast %4 : f32 to vector<8x128xf32>
    %140 = arith.mulf %84, %139 : vector<8x128xf32>
    %141 = vector.broadcast %37 : f32 to vector<8x128xf32>
    %142 = arith.addf %140, %141 : vector<8x128xf32>
    %143 = vector.broadcast %15 : f32 to vector<8x128xf32>
    %144 = arith.mulf %87, %143 : vector<8x128xf32>
    %145 = arith.addf %142, %144 : vector<8x128xf32>
    %146 = vector.broadcast %26 : f32 to vector<8x128xf32>
    %147 = arith.mulf %90, %146 : vector<8x128xf32>
    %148 = arith.addf %145, %147 : vector<8x128xf32>
    %cst_56 = arith.constant 0.000000e+00 : f32
    %149 = vector.broadcast %cst_56 : f32 to vector<8x128xf32>
    %150 = arith.maximumf %148, %149 : vector<8x128xf32>
    %151 = vector.broadcast %5 : f32 to vector<8x128xf32>
    %152 = arith.mulf %84, %151 : vector<8x128xf32>
    %153 = vector.broadcast %38 : f32 to vector<8x128xf32>
    %154 = arith.addf %152, %153 : vector<8x128xf32>
    %155 = vector.broadcast %16 : f32 to vector<8x128xf32>
    %156 = arith.mulf %87, %155 : vector<8x128xf32>
    %157 = arith.addf %154, %156 : vector<8x128xf32>
    %158 = vector.broadcast %27 : f32 to vector<8x128xf32>
    %159 = arith.mulf %90, %158 : vector<8x128xf32>
    %160 = arith.addf %157, %159 : vector<8x128xf32>
    %cst_57 = arith.constant 0.000000e+00 : f32
    %161 = vector.broadcast %cst_57 : f32 to vector<8x128xf32>
    %162 = arith.maximumf %160, %161 : vector<8x128xf32>
    %163 = vector.broadcast %6 : f32 to vector<8x128xf32>
    %164 = arith.mulf %84, %163 : vector<8x128xf32>
    %165 = vector.broadcast %39 : f32 to vector<8x128xf32>
    %166 = arith.addf %164, %165 : vector<8x128xf32>
    %167 = vector.broadcast %17 : f32 to vector<8x128xf32>
    %168 = arith.mulf %87, %167 : vector<8x128xf32>
    %169 = arith.addf %166, %168 : vector<8x128xf32>
    %170 = vector.broadcast %28 : f32 to vector<8x128xf32>
    %171 = arith.mulf %90, %170 : vector<8x128xf32>
    %172 = arith.addf %169, %171 : vector<8x128xf32>
    %cst_58 = arith.constant 0.000000e+00 : f32
    %173 = vector.broadcast %cst_58 : f32 to vector<8x128xf32>
    %174 = arith.maximumf %172, %173 : vector<8x128xf32>
    %175 = vector.broadcast %7 : f32 to vector<8x128xf32>
    %176 = arith.mulf %84, %175 : vector<8x128xf32>
    %177 = vector.broadcast %40 : f32 to vector<8x128xf32>
    %178 = arith.addf %176, %177 : vector<8x128xf32>
    %179 = vector.broadcast %18 : f32 to vector<8x128xf32>
    %180 = arith.mulf %87, %179 : vector<8x128xf32>
    %181 = arith.addf %178, %180 : vector<8x128xf32>
    %182 = vector.broadcast %29 : f32 to vector<8x128xf32>
    %183 = arith.mulf %90, %182 : vector<8x128xf32>
    %184 = arith.addf %181, %183 : vector<8x128xf32>
    %cst_59 = arith.constant 0.000000e+00 : f32
    %185 = vector.broadcast %cst_59 : f32 to vector<8x128xf32>
    %186 = arith.maximumf %184, %185 : vector<8x128xf32>
    %187 = vector.broadcast %8 : f32 to vector<8x128xf32>
    %188 = arith.mulf %84, %187 : vector<8x128xf32>
    %189 = vector.broadcast %41 : f32 to vector<8x128xf32>
    %190 = arith.addf %188, %189 : vector<8x128xf32>
    %191 = vector.broadcast %19 : f32 to vector<8x128xf32>
    %192 = arith.mulf %87, %191 : vector<8x128xf32>
    %193 = arith.addf %190, %192 : vector<8x128xf32>
    %194 = vector.broadcast %30 : f32 to vector<8x128xf32>
    %195 = arith.mulf %90, %194 : vector<8x128xf32>
    %196 = arith.addf %193, %195 : vector<8x128xf32>
    %cst_60 = arith.constant 0.000000e+00 : f32
    %197 = vector.broadcast %cst_60 : f32 to vector<8x128xf32>
    %198 = arith.maximumf %196, %197 : vector<8x128xf32>
    %199 = vector.broadcast %9 : f32 to vector<8x128xf32>
    %200 = arith.mulf %84, %199 : vector<8x128xf32>
    %201 = vector.broadcast %42 : f32 to vector<8x128xf32>
    %202 = arith.addf %200, %201 : vector<8x128xf32>
    %203 = vector.broadcast %20 : f32 to vector<8x128xf32>
    %204 = arith.mulf %87, %203 : vector<8x128xf32>
    %205 = arith.addf %202, %204 : vector<8x128xf32>
    %206 = vector.broadcast %31 : f32 to vector<8x128xf32>
    %207 = arith.mulf %90, %206 : vector<8x128xf32>
    %208 = arith.addf %205, %207 : vector<8x128xf32>
    %cst_61 = arith.constant 0.000000e+00 : f32
    %209 = vector.broadcast %cst_61 : f32 to vector<8x128xf32>
    %210 = arith.maximumf %208, %209 : vector<8x128xf32>
    %211 = vector.broadcast %10 : f32 to vector<8x128xf32>
    %212 = arith.mulf %84, %211 : vector<8x128xf32>
    %213 = vector.broadcast %43 : f32 to vector<8x128xf32>
    %214 = arith.addf %212, %213 : vector<8x128xf32>
    %215 = vector.broadcast %21 : f32 to vector<8x128xf32>
    %216 = arith.mulf %87, %215 : vector<8x128xf32>
    %217 = arith.addf %214, %216 : vector<8x128xf32>
    %218 = vector.broadcast %32 : f32 to vector<8x128xf32>
    %219 = arith.mulf %90, %218 : vector<8x128xf32>
    %220 = arith.addf %217, %219 : vector<8x128xf32>
    %cst_62 = arith.constant 0.000000e+00 : f32
    %221 = vector.broadcast %cst_62 : f32 to vector<8x128xf32>
    %222 = arith.maximumf %220, %221 : vector<8x128xf32>
    %223 = vector.broadcast %44 : f32 to vector<8x128xf32>
    %224 = arith.mulf %102, %223 : vector<8x128xf32>
    %225 = vector.broadcast %77 : f32 to vector<8x128xf32>
    %226 = arith.addf %224, %225 : vector<8x128xf32>
    %227 = vector.broadcast %47 : f32 to vector<8x128xf32>
    %228 = arith.mulf %114, %227 : vector<8x128xf32>
    %229 = arith.addf %226, %228 : vector<8x128xf32>
    %230 = vector.broadcast %50 : f32 to vector<8x128xf32>
    %231 = arith.mulf %126, %230 : vector<8x128xf32>
    %232 = arith.addf %229, %231 : vector<8x128xf32>
    %233 = vector.broadcast %53 : f32 to vector<8x128xf32>
    %234 = arith.mulf %138, %233 : vector<8x128xf32>
    %235 = arith.addf %232, %234 : vector<8x128xf32>
    %236 = vector.broadcast %56 : f32 to vector<8x128xf32>
    %237 = arith.mulf %150, %236 : vector<8x128xf32>
    %238 = arith.addf %235, %237 : vector<8x128xf32>
    %239 = vector.broadcast %59 : f32 to vector<8x128xf32>
    %240 = arith.mulf %162, %239 : vector<8x128xf32>
    %241 = arith.addf %238, %240 : vector<8x128xf32>
    %242 = vector.broadcast %62 : f32 to vector<8x128xf32>
    %243 = arith.mulf %174, %242 : vector<8x128xf32>
    %244 = arith.addf %241, %243 : vector<8x128xf32>
    %245 = vector.broadcast %65 : f32 to vector<8x128xf32>
    %246 = arith.mulf %186, %245 : vector<8x128xf32>
    %247 = arith.addf %244, %246 : vector<8x128xf32>
    %248 = vector.broadcast %68 : f32 to vector<8x128xf32>
    %249 = arith.mulf %198, %248 : vector<8x128xf32>
    %250 = arith.addf %247, %249 : vector<8x128xf32>
    %251 = vector.broadcast %71 : f32 to vector<8x128xf32>
    %252 = arith.mulf %210, %251 : vector<8x128xf32>
    %253 = arith.addf %250, %252 : vector<8x128xf32>
    %254 = vector.broadcast %74 : f32 to vector<8x128xf32>
    %255 = arith.mulf %222, %254 : vector<8x128xf32>
    %256 = arith.addf %253, %255 : vector<8x128xf32>
    %257 = vector.broadcast %45 : f32 to vector<8x128xf32>
    %258 = arith.mulf %102, %257 : vector<8x128xf32>
    %259 = vector.broadcast %78 : f32 to vector<8x128xf32>
    %260 = arith.addf %258, %259 : vector<8x128xf32>
    %261 = vector.broadcast %48 : f32 to vector<8x128xf32>
    %262 = arith.mulf %114, %261 : vector<8x128xf32>
    %263 = arith.addf %260, %262 : vector<8x128xf32>
    %264 = vector.broadcast %51 : f32 to vector<8x128xf32>
    %265 = arith.mulf %126, %264 : vector<8x128xf32>
    %266 = arith.addf %263, %265 : vector<8x128xf32>
    %267 = vector.broadcast %54 : f32 to vector<8x128xf32>
    %268 = arith.mulf %138, %267 : vector<8x128xf32>
    %269 = arith.addf %266, %268 : vector<8x128xf32>
    %270 = vector.broadcast %57 : f32 to vector<8x128xf32>
    %271 = arith.mulf %150, %270 : vector<8x128xf32>
    %272 = arith.addf %269, %271 : vector<8x128xf32>
    %273 = vector.broadcast %60 : f32 to vector<8x128xf32>
    %274 = arith.mulf %162, %273 : vector<8x128xf32>
    %275 = arith.addf %272, %274 : vector<8x128xf32>
    %276 = vector.broadcast %63 : f32 to vector<8x128xf32>
    %277 = arith.mulf %174, %276 : vector<8x128xf32>
    %278 = arith.addf %275, %277 : vector<8x128xf32>
    %279 = vector.broadcast %66 : f32 to vector<8x128xf32>
    %280 = arith.mulf %186, %279 : vector<8x128xf32>
    %281 = arith.addf %278, %280 : vector<8x128xf32>
    %282 = vector.broadcast %69 : f32 to vector<8x128xf32>
    %283 = arith.mulf %198, %282 : vector<8x128xf32>
    %284 = arith.addf %281, %283 : vector<8x128xf32>
    %285 = vector.broadcast %72 : f32 to vector<8x128xf32>
    %286 = arith.mulf %210, %285 : vector<8x128xf32>
    %287 = arith.addf %284, %286 : vector<8x128xf32>
    %288 = vector.broadcast %75 : f32 to vector<8x128xf32>
    %289 = arith.mulf %222, %288 : vector<8x128xf32>
    %290 = arith.addf %287, %289 : vector<8x128xf32>
    %291 = vector.broadcast %46 : f32 to vector<8x128xf32>
    %292 = arith.mulf %102, %291 : vector<8x128xf32>
    %293 = vector.broadcast %79 : f32 to vector<8x128xf32>
    %294 = arith.addf %292, %293 : vector<8x128xf32>
    %295 = vector.broadcast %49 : f32 to vector<8x128xf32>
    %296 = arith.mulf %114, %295 : vector<8x128xf32>
    %297 = arith.addf %294, %296 : vector<8x128xf32>
    %298 = vector.broadcast %52 : f32 to vector<8x128xf32>
    %299 = arith.mulf %126, %298 : vector<8x128xf32>
    %300 = arith.addf %297, %299 : vector<8x128xf32>
    %301 = vector.broadcast %55 : f32 to vector<8x128xf32>
    %302 = arith.mulf %138, %301 : vector<8x128xf32>
    %303 = arith.addf %300, %302 : vector<8x128xf32>
    %304 = vector.broadcast %58 : f32 to vector<8x128xf32>
    %305 = arith.mulf %150, %304 : vector<8x128xf32>
    %306 = arith.addf %303, %305 : vector<8x128xf32>
    %307 = vector.broadcast %61 : f32 to vector<8x128xf32>
    %308 = arith.mulf %162, %307 : vector<8x128xf32>
    %309 = arith.addf %306, %308 : vector<8x128xf32>
    %310 = vector.broadcast %64 : f32 to vector<8x128xf32>
    %311 = arith.mulf %174, %310 : vector<8x128xf32>
    %312 = arith.addf %309, %311 : vector<8x128xf32>
    %313 = vector.broadcast %67 : f32 to vector<8x128xf32>
    %314 = arith.mulf %186, %313 : vector<8x128xf32>
    %315 = arith.addf %312, %314 : vector<8x128xf32>
    %316 = vector.broadcast %70 : f32 to vector<8x128xf32>
    %317 = arith.mulf %198, %316 : vector<8x128xf32>
    %318 = arith.addf %315, %317 : vector<8x128xf32>
    %319 = vector.broadcast %73 : f32 to vector<8x128xf32>
    %320 = arith.mulf %210, %319 : vector<8x128xf32>
    %321 = arith.addf %318, %320 : vector<8x128xf32>
    %322 = vector.broadcast %76 : f32 to vector<8x128xf32>
    %323 = arith.mulf %222, %322 : vector<8x128xf32>
    %324 = arith.addf %321, %323 : vector<8x128xf32>
    %325 = arith.maximumf %256, %290 : vector<8x128xf32>
    %326 = arith.maximumf %325, %324 : vector<8x128xf32>
    %327 = arith.subf %256, %326 : vector<8x128xf32>
    %328 = math.exp %327 : vector<8x128xf32>
    %329 = arith.subf %290, %326 : vector<8x128xf32>
    %330 = math.exp %329 : vector<8x128xf32>
    %331 = arith.subf %324, %326 : vector<8x128xf32>
    %332 = math.exp %331 : vector<8x128xf32>
    %333 = arith.addf %328, %330 : vector<8x128xf32>
    %334 = arith.addf %333, %332 : vector<8x128xf32>
    %cst_63 = arith.constant 1.000000e+00 : f32
    %335 = vector.broadcast %cst_63 : f32 to vector<8x128xf32>
    %336 = arith.divf %335, %334 : vector<8x128xf32>
    %337 = arith.mulf %328, %336 : vector<8x128xf32>
    %c0_64 = arith.constant 0 : index
    %338 = arith.index_cast %81 : i32 to index
    %c0_65 = arith.constant 0 : index
    %339 = vector.load %arg6[%c0_64, %338, %c0_65] : memref<3x8x128xf32, #tpu.memory_space<vmem>>, vector<1x8x128xf32>
    %340 = vector.shape_cast %339 : vector<1x8x128xf32> to vector<8x128xf32>
    %341 = vector.shape_cast %337 : vector<8x128xf32> to vector<1x8x128xf32>
    tpu.vector_store %arg6[%c0_64, %338, %c0_65], %341 {strides = array<i32>} : memref<3x8x128xf32, #tpu.memory_space<vmem>>, vector<1x8x128xf32>,
    %342 = arith.mulf %330, %336 : vector<8x128xf32>
    %c1_66 = arith.constant 1 : index
    %343 = arith.index_cast %81 : i32 to index
    %c0_67 = arith.constant 0 : index
    %344 = vector.load %arg6[%c1_66, %343, %c0_67] : memref<3x8x128xf32, #tpu.memory_space<vmem>>, vector<1x8x128xf32>
    %345 = vector.shape_cast %344 : vector<1x8x128xf32> to vector<8x128xf32>
    %346 = vector.shape_cast %342 : vector<8x128xf32> to vector<1x8x128xf32>
    tpu.vector_store %arg6[%c1_66, %343, %c0_67], %346 {strides = array<i32>} : memref<3x8x128xf32, #tpu.memory_space<vmem>>, vector<1x8x128xf32>,
    %347 = arith.mulf %332, %336 : vector<8x128xf32>
    %c2_68 = arith.constant 2 : index
    %348 = arith.index_cast %81 : i32 to index
    %c0_69 = arith.constant 0 : index
    %349 = vector.load %arg6[%c2_68, %348, %c0_69] : memref<3x8x128xf32, #tpu.memory_space<vmem>>, vector<1x8x128xf32>
    %350 = vector.shape_cast %349 : vector<1x8x128xf32> to vector<8x128xf32>
    %351 = vector.shape_cast %347 : vector<8x128xf32> to vector<1x8x128xf32>
    tpu.vector_store %arg6[%c2_68, %348, %c0_69], %351 {strides = array<i32>} : memref<3x8x128xf32, #tpu.memory_space<vmem>>, vector<1x8x128xf32>,
    %c1_i32 = arith.constant 1 : i32
    return
  }
  func.func @transform_0(%arg0: i32) -> (i32, i32, i32) {
    %c0_i32 = arith.constant 0 : i32
    %c0_i32_0 = arith.constant 0 : i32
    %c0_i32_1 = arith.constant 0 : i32
    return %c0_i32, %arg0, %c0_i32_0 : i32, i32, i32
  }
  func.func @transform_1(%arg0: i32) -> i32 {
    %c0_i32 = arith.constant 0 : i32
    %c0_i32_0 = arith.constant 0 : i32
    return %c0_i32 : i32
  }
  func.func @transform_2(%arg0: i32) -> i32 {
    %c0_i32 = arith.constant 0 : i32
    %c0_i32_0 = arith.constant 0 : i32
    return %c0_i32 : i32
  }
  func.func @transform_3(%arg0: i32) -> i32 {
    %c0_i32 = arith.constant 0 : i32
    %c0_i32_0 = arith.constant 0 : i32
    return %c0_i32 : i32
  }
  func.func @transform_4(%arg0: i32) -> i32 {
    %c0_i32 = arith.constant 0 : i32
    %c0_i32_0 = arith.constant 0 : i32
    return %c0_i32 : i32
  }
  func.func @transform_5(%arg0: i32) -> (i32, i32, i32) {
    %c0_i32 = arith.constant 0 : i32
    %c0_i32_0 = arith.constant 0 : i32
    %c0_i32_1 = arith.constant 0 : i32
    return %c0_i32, %arg0, %c0_i32_0 : i32, i32, i32
  }
}

</mosaic_0001>

<llo_original>
// kernel: tpu_custom_call.1
$region0: #{tpu_custom_call.1}
  #allocation0 [shape = 'u32[]', space=smem, size = 0x4, offset = 0x4, fixed_abs, tag = 'smem constant byte address 0x4 - core index']
  #allocation1 [shape = 'u32[144,128]{1,0:T(1,128)}', space=vmem, size = 0x12000, scoped, tag = 'internal scratch']
  %s0 = inlined_call_operand.hbm [shape: f32[3,8,128], index: 0, kind: input, shape index: {}]
  %s1 = inlined_call_operand.vmem [shape: f32[33], index: 1, kind: input, shape index: {}]
  %s2 = inlined_call_operand.vmem [shape: f32[11], index: 2, kind: input, shape index: {}]
  %s3 = inlined_call_operand.vmem [shape: f32[33], index: 3, kind: input, shape index: {}]
  %s4 = inlined_call_operand.vmem [shape: f32[3], index: 4, kind: input, shape index: {}]
  %s5 = inlined_call_operand.hbm [shape: f32[3,8,128], index: 5, kind: output, shape index: {}]
  %s6 = sld [smem:[#allocation0]]
  $region50: #{tpu_custom_call.1} parent=0
    _
  %s8 = ssub.s32 1, %s6
  %s9 = scalar_select 0, %s8, %s6
  $region1: #{tpu_custom_call.1} parent=0
    #allocation2 [shape = 'u8[12288]{0}', space=vmem, size = 0x3000, scoped, tag = 'input window, operand 0, single buffered']
    #allocation3 [shape = 's32[1]{0}', space=sflag, size = 0x4, scoped, tag = 'scoped memory for tpu_custom_call.1']
    #allocation4 [shape = 's32[1]{0}', space=sflag, size = 0x4, scoped, tag = 'scoped memory for tpu_custom_call.1']
    #allocation5 [shape = 's32[1]{0}', space=sflag, size = 0x4, scoped, tag = 'scoped memory for tpu_custom_call.1']
    #allocation6 [shape = 'u8[512]{0}', space=smem, size = 0x200, scoped, tag = 'input window, operand 1, single buffered']
    #allocation7 [shape = 'u8[512]{0}', space=smem, size = 0x200, scoped, tag = 'input window, operand 2, single buffered']
    #allocation8 [shape = 's32[1]{0}', space=sflag, size = 0x4, scoped, tag = 'scoped memory for tpu_custom_call.1']
    #allocation9 [shape = 'u8[512]{0}', space=smem, size = 0x200, scoped, tag = 'input window, operand 3, single buffered']
    #allocation10 [shape = 'u8[512]{0}', space=smem, size = 0x200, scoped, tag = 'input window, operand 4, single buffered']
    #allocation11 [shape = 's32[1]{0}', space=sflag, size = 0x4, scoped, tag = 'scoped memory for tpu_custom_call.1']
    #allocation12 [shape = 'u8[12288]{0}', space=vmem, size = 0x3000, scoped, tag = 'output window, operand 0, single buffered']
    %10 = vsyncpa [#allocation3], 0
    %11 = vsyncpa [#allocation5], 0
    %12 = vsyncpa [#allocation8], 0
    %13 = vsyncpa [#allocation11], 0
    %14 = vsyncpa [#allocation4], 0
    // Predicated region
    $region2: #{tpu_custom_call.1} parent=1 // pred_check
      _
    $region3: #{tpu_custom_call.1} parent=1 // pred_check_branch
      %16 = sbr.rel (0) target = $region5
    $region4: #{tpu_custom_call.1} parent=1 // pred_region
      %s18 = ssub.s32 384, 384
      %19 = vsyncadd [#allocation3], %s18
      %s20 = sshll.u32 [#allocation2], 4
      %s21 = int_to_ptr.vmem [resolvable:$true] %s20
      %26 = dma.hbm_to_vmem [thread:$0]  %s0, 384, %s21, [#allocation3], 128, 128, 8
    $region5: #{tpu_custom_call.1} parent=1 // pred_fallthru
      _
    // Predicated region
    $region6: #{tpu_custom_call.1} parent=1 // pred_check
      _
    $region7: #{tpu_custom_call.1} parent=1 // pred_check_branch
      %28 = sbr.rel (0) target = $region9
    $region8: #{tpu_custom_call.1} parent=1 // pred_region
      %s30 = ssub.s32 16, 16
      %31 = vsyncadd [#allocation5], %s30
      %s33 = sshll.u32 %s1, 4
      %s34 = int_to_ptr.vmem [resolvable:$true] %s33
      %36 = dma.vmem_to_smem %s34, 16, [#allocation6], [#allocation5]
    $region9: #{tpu_custom_call.1} parent=1 // pred_fallthru
      _
    // Predicated region
    $region10: #{tpu_custom_call.1} parent=1 // pred_check
      _
    $region11: #{tpu_custom_call.1} parent=1 // pred_check_branch
      %38 = sbr.rel (0) target = $region13
    $region12: #{tpu_custom_call.1} parent=1 // pred_region
      %s40 = ssub.s32 16, 16
      %41 = vsyncadd [#allocation8], %s40
      %s43 = sshll.u32 %s2, 4
      %s44 = int_to_ptr.vmem [resolvable:$true] %s43
      %46 = dma.vmem_to_smem %s44, 16, [#allocation7], [#allocation8]
    $region13: #{tpu_custom_call.1} parent=1 // pred_fallthru
      _
    // Predicated region
    $region14: #{tpu_custom_call.1} parent=1 // pred_check
      _
    $region15: #{tpu_custom_call.1} parent=1 // pred_check_branch
      %48 = sbr.rel (0) target = $region17
    $region16: #{tpu_custom_call.1} parent=1 // pred_region
      %s50 = ssub.s32 16, 16
      %51 = vsyncadd [#allocation8], %s50
      %s53 = sshll.u32 %s3, 4
      %s54 = int_to_ptr.vmem [resolvable:$true] %s53
      %56 = dma.vmem_to_smem %s54, 16, [#allocation9], [#allocation8]
    $region17: #{tpu_custom_call.1} parent=1 // pred_fallthru
      _
    // Predicated region
    $region18: #{tpu_custom_call.1} parent=1 // pred_check
      _
    $region19: #{tpu_custom_call.1} parent=1 // pred_check_branch
      %58 = sbr.rel (0) target = $region21
    $region20: #{tpu_custom_call.1} parent=1 // pred_region
      %s60 = ssub.s32 16, 16
      %61 = vsyncadd [#allocation11], %s60
      %s63 = sshll.u32 %s4, 4
      %s64 = int_to_ptr.vmem [resolvable:$true] %s63
      %66 = dma.vmem_to_smem %s64, 16, [#allocation10], [#allocation11]
    $region21: #{tpu_custom_call.1} parent=1 // pred_fallthru
      _
    // Predicated region
    $region22: #{tpu_custom_call.1} parent=1 // pred_check
      _
    $region23: #{tpu_custom_call.1} parent=1 // pred_check_branch
      %68 = sbr.rel (0) target = $region25
    $region24: #{tpu_custom_call.1} parent=1 // pred_region
      %69 = dma.done [#allocation3], 384
    $region25: #{tpu_custom_call.1} parent=1 // pred_fallthru
      _
    // Predicated region
    $region26: #{tpu_custom_call.1} parent=1 // pred_check
      _
    $region27: #{tpu_custom_call.1} parent=1 // pred_check_branch
      %71 = sbr.rel (0) target = $region29
    $region28: #{tpu_custom_call.1} parent=1 // pred_region
      %72 = dma.done [#allocation5], 16
    $region29: #{tpu_custom_call.1} parent=1 // pred_fallthru
      _
    // Predicated region
    $region30: #{tpu_custom_call.1} parent=1 // pred_check
      _
    $region31: #{tpu_custom_call.1} parent=1 // pred_check_branch
      %74 = sbr.rel (0) target = $region33
    $region32: #{tpu_custom_call.1} parent=1 // pred_region
      %75 = dma.done [#allocation8], 16
    $region33: #{tpu_custom_call.1} parent=1 // pred_fallthru
      _
    // Predicated region
    $region34: #{tpu_custom_call.1} parent=1 // pred_check
      _
    $region35: #{tpu_custom_call.1} parent=1 // pred_check_branch
      %77 = sbr.rel (0) target = $region37
    $region36: #{tpu_custom_call.1} parent=1 // pred_region
      %78 = dma.done [#allocation8], 16
    $region37: #{tpu_custom_call.1} parent=1 // pred_fallthru
      _
    // Predicated region
    $region38: #{tpu_custom_call.1} parent=1 // pred_check
      _
    $region39: #{tpu_custom_call.1} parent=1 // pred_check_branch
      %80 = sbr.rel (0) target = $region41
    $region40: #{tpu_custom_call.1} parent=1 // pred_region
      %81 = dma.done [#allocation11], 16
    $region41: #{tpu_custom_call.1} parent=1 // pred_fallthru
      _
    %82 = sfence
    %s83 = sld [smem:[#allocation6]]
    %s84 = sld [smem:[#allocation6 + $0x1]]
    %s85 = sld [smem:[#allocation6 + $0x2]]
    %s86 = sld [smem:[#allocation6 + $0x3]]
    %s87 = sld [smem:[#allocation6 + $0x4]]
    %s88 = sld [smem:[#allocation6 + $0x5]]
    %s89 = sld [smem:[#allocation6 + $0x6]]
    %s90 = sld [smem:[#allocation6 + $0x7]]
    %s91 = sld [smem:[#allocation6 + $0x8]]
    %s92 = sld [smem:[#allocation6 + $0x9]]
    %s93 = sld [smem:[#allocation6 + $0xa]]
    %s94 = sld [smem:[#allocation6 + $0xb]]
    %s95 = sld [smem:[#allocation6 + $0xc]]
    %s96 = sld [smem:[#allocation6 + $0xd]]
    %s97 = sld [smem:[#allocation6 + $0xe]]
    %s98 = sld [smem:[#allocation6 + $0xf]]
    %s99 = sld [smem:[#allocation6 + $0x10]]
    %s100 = sld [smem:[#allocation6 + $0x11]]
    %s101 = sld [smem:[#allocation6 + $0x12]]
    %s102 = sld [smem:[#allocation6 + $0x13]]
    %s103 = sld [smem:[#allocation6 + $0x14]]
    %s104 = sld [smem:[#allocation6 + $0x15]]
    %s105 = sld [smem:[#allocation6 + $0x16]]
    %s106 = sld [smem:[#allocation6 + $0x17]]
    %s107 = sld [smem:[#allocation6 + $0x18]]
    %s108 = sld [smem:[#allocation6 + $0x19]]
    %s109 = sld [smem:[#allocation6 + $0x1a]]
    %s110 = sld [smem:[#allocation6 + $0x1b]]
    %s111 = sld [smem:[#allocation6 + $0x1c]]
    %s112 = sld [smem:[#allocation6 + $0x1d]]
    %s113 = sld [smem:[#allocation6 + $0x1e]]
    %s114 = sld [smem:[#allocation6 + $0x1f]]
    %s115 = sld [smem:[#allocation6 + $0x20]]
    %s116 = sld [smem:[#allocation7]]
    %s117 = sld [smem:[#allocation7 + $0x1]]
    %s118 = sld [smem:[#allocation7 + $0x2]]
    %s119 = sld [smem:[#allocation7 + $0x3]]
    %s120 = sld [smem:[#allocation7 + $0x4]]
    %s121 = sld [smem:[#allocation7 + $0x5]]
    %s122 = sld [smem:[#allocation7 + $0x6]]
    %s123 = sld [smem:[#allocation7 + $0x7]]
    %s124 = sld [smem:[#allocation7 + $0x8]]
    %s125 = sld [smem:[#allocation7 + $0x9]]
    %s126 = sld [smem:[#allocation7 + $0xa]]
    %s127 = sld [smem:[#allocation9]]
    %s128 = sld [smem:[#allocation9 + $0x1]]
    %s129 = sld [smem:[#allocation9 + $0x2]]
    %s130 = sld [smem:[#allocation9 + $0x3]]
    %s131 = sld [smem:[#allocation9 + $0x4]]
    %s132 = sld [smem:[#allocation9 + $0x5]]
    %s133 = sld [smem:[#allocation9 + $0x6]]
    %s134 = sld [smem:[#allocation9 + $0x7]]
    %s135 = sld [smem:[#allocation9 + $0x8]]
    %s136 = sld [smem:[#allocation9 + $0x9]]
    %s137 = sld [smem:[#allocation9 + $0xa]]
    %s138 = sld [smem:[#allocation9 + $0xb]]
    %s139 = sld [smem:[#allocation9 + $0xc]]
    %s140 = sld [smem:[#allocation9 + $0xd]]
    %s141 = sld [smem:[#allocation9 + $0xe]]
    %s142 = sld [smem:[#allocation9 + $0xf]]
    %s143 = sld [smem:[#allocation9 + $0x10]]
    %s144 = sld [smem:[#allocation9 + $0x11]]
    %s145 = sld [smem:[#allocation9 + $0x12]]
    %s146 = sld [smem:[#allocation9 + $0x13]]
    %s147 = sld [smem:[#allocation9 + $0x14]]
    %s148 = sld [smem:[#allocation9 + $0x15]]
    %s149 = sld [smem:[#allocation9 + $0x16]]
    %s150 = sld [smem:[#allocation9 + $0x17]]
    %s151 = sld [smem:[#allocation9 + $0x18]]
    %s152 = sld [smem:[#allocation9 + $0x19]]
    %s153 = sld [smem:[#allocation9 + $0x1a]]
    %s154 = sld [smem:[#allocation9 + $0x1b]]
    %s155 = sld [smem:[#allocation9 + $0x1c]]
    %s156 = sld [smem:[#allocation9 + $0x1d]]
    %s157 = sld [smem:[#allocation9 + $0x1e]]
    %s158 = sld [smem:[#allocation9 + $0x1f]]
    %s159 = sld [smem:[#allocation9 + $0x20]]
    %s160 = sld [smem:[#allocation10]]
    %s161 = sld [smem:[#allocation10 + $0x1]]
    %s162 = sld [smem:[#allocation10 + $0x2]]
    %v163 = vld [vmem:[#allocation2] sm:$0xff]
    %s164 = sadd.s32 0, 8
    %s165 = scalar_lea.vmem [#allocation2], %s164
    %v166 = vld [vmem:[%s165] sm:$0xff]
    %s167 = sadd.s32 0, 16
    %s168 = scalar_lea.vmem [#allocation2], %s167
    %v169 = vld [vmem:[%s168] sm:$0xff]
    %v170 = vstv %s83
    %v171 = vmul.f32 %v163, %v170
    %v172 = vstv %s116
    %v173 = vadd.f32 %v171, %v172
    %v174 = vstv %s94
    %v175 = vmul.f32 %v166, %v174
    %v176 = vadd.f32 %v173, %v175
    %v177 = vstv %s105
    %v178 = vmul.f32 %v169, %v177
    %v179 = vadd.f32 %v176, %v178
    %v180 = vmax.f32 %v179, 0.0
    %v181 = vstv %s84
    %v182 = vmul.f32 %v163, %v181
    %v183 = vstv %s117
    %v184 = vadd.f32 %v182, %v183
    %v185 = vstv %s95
    %v186 = vmul.f32 %v166, %v185
    %v187 = vadd.f32 %v184, %v186
    %v188 = vstv %s106
    %v189 = vmul.f32 %v169, %v188
    %v190 = vadd.f32 %v187, %v189
    %v191 = vmax.f32 %v190, 0.0
    %v192 = vstv %s85
    %v193 = vmul.f32 %v163, %v192
    %v194 = vstv %s118
    %v195 = vadd.f32 %v193, %v194
    %v196 = vstv %s96
    %v197 = vmul.f32 %v166, %v196
    %v198 = vadd.f32 %v195, %v197
    %v199 = vstv %s107
    %v200 = vmul.f32 %v169, %v199
    %v201 = vadd.f32 %v198, %v200
    %v202 = vmax.f32 %v201, 0.0
    %v203 = vstv %s86
    %v204 = vmul.f32 %v163, %v203
    %v205 = vstv %s119
    %v206 = vadd.f32 %v204, %v205
    %v207 = vstv %s97
    %v208 = vmul.f32 %v166, %v207
    %v209 = vadd.f32 %v206, %v208
    %v210 = vstv %s108
    %v211 = vmul.f32 %v169, %v210
    %v212 = vadd.f32 %v209, %v211
    %v213 = vmax.f32 %v212, 0.0
    %v214 = vstv %s87
    %v215 = vmul.f32 %v163, %v214
    %v216 = vstv %s120
    %v217 = vadd.f32 %v215, %v216
    %v218 = vstv %s98
    %v219 = vmul.f32 %v166, %v218
    %v220 = vadd.f32 %v217, %v219
    %v221 = vstv %s109
    %v222 = vmul.f32 %v169, %v221
    %v223 = vadd.f32 %v220, %v222
    %v224 = vmax.f32 %v223, 0.0
    %v225 = vstv %s88
    %v226 = vmul.f32 %v163, %v225
    %v227 = vstv %s121
    %v228 = vadd.f32 %v226, %v227
    %v229 = vstv %s99
    %v230 = vmul.f32 %v166, %v229
    %v231 = vadd.f32 %v228, %v230
    %v232 = vstv %s110
    %v233 = vmul.f32 %v169, %v232
    %v234 = vadd.f32 %v231, %v233
    %v235 = vmax.f32 %v234, 0.0
    %v236 = vstv %s89
    %v237 = vmul.f32 %v163, %v236
    %v238 = vstv %s122
    %v239 = vadd.f32 %v237, %v238
    %v240 = vstv %s100
    %v241 = vmul.f32 %v166, %v240
    %v242 = vadd.f32 %v239, %v241
    %v243 = vstv %s111
    %v244 = vmul.f32 %v169, %v243
    %v245 = vadd.f32 %v242, %v244
    %v246 = vmax.f32 %v245, 0.0
    %v247 = vstv %s90
    %v248 = vmul.f32 %v163, %v247
    %v249 = vstv %s123
    %v250 = vadd.f32 %v248, %v249
    %v251 = vstv %s101
    %v252 = vmul.f32 %v166, %v251
    %v253 = vadd.f32 %v250, %v252
    %v254 = vstv %s112
    %v255 = vmul.f32 %v169, %v254
    %v256 = vadd.f32 %v253, %v255
    %v257 = vmax.f32 %v256, 0.0
    %v258 = vstv %s91
    %v259 = vmul.f32 %v163, %v258
    %v260 = vstv %s124
    %v261 = vadd.f32 %v259, %v260
    %v262 = vstv %s102
    %v263 = vmul.f32 %v166, %v262
    %v264 = vadd.f32 %v261, %v263
    %v265 = vstv %s113
    %v266 = vmul.f32 %v169, %v265
    %v267 = vadd.f32 %v264, %v266
    %v268 = vmax.f32 %v267, 0.0
    %v269 = vstv %s92
    %v270 = vmul.f32 %v163, %v269
    %v271 = vstv %s125
    %v272 = vadd.f32 %v270, %v271
    %v273 = vstv %s103
    %v274 = vmul.f32 %v166, %v273
    %v275 = vadd.f32 %v272, %v274
    %v276 = vstv %s114
    %v277 = vmul.f32 %v169, %v276
    %v278 = vadd.f32 %v275, %v277
    %v279 = vmax.f32 %v278, 0.0
    %v280 = vstv %s93
    %v281 = vmul.f32 %v163, %v280
    %v282 = vstv %s126
    %v283 = vadd.f32 %v281, %v282
    %v284 = vstv %s104
    %v285 = vmul.f32 %v166, %v284
    %v286 = vadd.f32 %v283, %v285
    %v287 = vstv %s115
    %v288 = vmul.f32 %v169, %v287
    %v289 = vadd.f32 %v286, %v288
    %v290 = vmax.f32 %v289, 0.0
    %v291 = vstv %s127
    %v292 = vmul.f32 %v180, %v291
    %v293 = vstv %s160
    %v294 = vadd.f32 %v292, %v293
    %v295 = vstv %s130
    %v296 = vmul.f32 %v191, %v295
    %v297 = vadd.f32 %v294, %v296
    %v298 = vstv %s133
    %v299 = vmul.f32 %v202, %v298
    %v300 = vadd.f32 %v297, %v299
    %v301 = vstv %s136
    %v302 = vmul.f32 %v213, %v301
    %v303 = vadd.f32 %v300, %v302
    %v304 = vstv %s139
    %v305 = vmul.f32 %v224, %v304
    %v306 = vadd.f32 %v303, %v305
    %v307 = vstv %s142
    %v308 = vmul.f32 %v235, %v307
    %v309 = vadd.f32 %v306, %v308
    %v310 = vstv %s145
    %v311 = vmul.f32 %v246, %v310
    %v312 = vadd.f32 %v309, %v311
    %v313 = vstv %s148
    %v314 = vmul.f32 %v257, %v313
    %v315 = vadd.f32 %v312, %v314
    %v316 = vstv %s151
    %v317 = vmul.f32 %v268, %v316
    %v318 = vadd.f32 %v315, %v317
    %v319 = vstv %s154
    %v320 = vmul.f32 %v279, %v319
    %v321 = vadd.f32 %v318, %v320
    %v322 = vstv %s157
    %v323 = vmul.f32 %v290, %v322
    %v324 = vadd.f32 %v321, %v323
    %v325 = vstv %s128
    %v326 = vmul.f32 %v180, %v325
    %v327 = vstv %s161
    %v328 = vadd.f32 %v326, %v327
    %v329 = vstv %s131
    %v330 = vmul.f32 %v191, %v329
    %v331 = vadd.f32 %v328, %v330
    %v332 = vstv %s134
    %v333 = vmul.f32 %v202, %v332
    %v334 = vadd.f32 %v331, %v333
    %v335 = vstv %s137
    %v336 = vmul.f32 %v213, %v335
    %v337 = vadd.f32 %v334, %v336
    %v338 = vstv %s140
    %v339 = vmul.f32 %v224, %v338
    %v340 = vadd.f32 %v337, %v339
    %v341 = vstv %s143
    %v342 = vmul.f32 %v235, %v341
    %v343 = vadd.f32 %v340, %v342
    %v344 = vstv %s146
    %v345 = vmul.f32 %v246, %v344
    %v346 = vadd.f32 %v343, %v345
    %v347 = vstv %s149
    %v348 = vmul.f32 %v257, %v347
    %v349 = vadd.f32 %v346, %v348
    %v350 = vstv %s152
    %v351 = vmul.f32 %v268, %v350
    %v352 = vadd.f32 %v349, %v351
    %v353 = vstv %s155
    %v354 = vmul.f32 %v279, %v353
    %v355 = vadd.f32 %v352, %v354
    %v356 = vstv %s158
    %v357 = vmul.f32 %v290, %v356
    %v358 = vadd.f32 %v355, %v357
    %v359 = vstv %s129
    %v360 = vmul.f32 %v180, %v359
    %v361 = vstv %s162
    %v362 = vadd.f32 %v360, %v361
    %v363 = vstv %s132
    %v364 = vmul.f32 %v191, %v363
    %v365 = vadd.f32 %v362, %v364
    %v366 = vstv %s135
    %v367 = vmul.f32 %v202, %v366
    %v368 = vadd.f32 %v365, %v367
    %v369 = vstv %s138
    %v370 = vmul.f32 %v213, %v369
    %v371 = vadd.f32 %v368, %v370
    %v372 = vstv %s141
    %v373 = vmul.f32 %v224, %v372
    %v374 = vadd.f32 %v371, %v373
    %v375 = vstv %s144
    %v376 = vmul.f32 %v235, %v375
    %v377 = vadd.f32 %v374, %v376
    %v378 = vstv %s147
    %v379 = vmul.f32 %v246, %v378
    %v380 = vadd.f32 %v377, %v379
    %v381 = vstv %s150
    %v382 = vmul.f32 %v257, %v381
    %v383 = vadd.f32 %v380, %v382
    %v384 = vstv %s153
    %v385 = vmul.f32 %v268, %v384
    %v386 = vadd.f32 %v383, %v385
    %v387 = vstv %s156
    %v388 = vmul.f32 %v279, %v387
    %v389 = vadd.f32 %v386, %v388
    %v390 = vstv %s159
    %v391 = vmul.f32 %v290, %v390
    %v392 = vadd.f32 %v389, %v391
    %v393 = vmax.f32 %v324, %v358
    %v394 = vmax.f32 %v393, %v392
    %v395 = vsub.f32 %v324, %v394
    %v396 = vmul.f32 %v395, 1.442695
    %v397 = vpow.pop %v396
    %v398 = vsub.f32 %v358, %v394
    %v399 = vmul.f32 %v398, 1.442695
    %v400 = vpow.pop %v399
    %v401 = vsub.f32 %v392, %v394
    %v402 = vmul.f32 %v401, 1.442695
    %v403 = vpow.pop %v402
    %v404 = vadd.f32 %v397, %v400
    %v405 = vadd.f32 %v404, %v403
    %v406 = vrcp.pop %v405
    %v407 = vmul.f32 1.0, %v406
    %v408 = vmul.f32 %v397, %v407
    %409 = vst [vmem:[#allocation12] sm:$0xff] %v408
    %v410 = vmul.f32 %v400, %v407
    %s411 = scalar_lea.vmem [#allocation12], %s164
    %412 = vst [vmem:[%s411] sm:$0xff] %v410
    %v413 = vmul.f32 %v403, %v407
    %s414 = scalar_lea.vmem [#allocation12], %s167
    %415 = vst [vmem:[%s414] sm:$0xff] %v413
    // Predicated region
    $region42: #{tpu_custom_call.1} parent=1 // pred_check
      _
    $region43: #{tpu_custom_call.1} parent=1 // pred_check_branch
      %417 = sbr.rel (0) target = $region45
    $region44: #{tpu_custom_call.1} parent=1 // pred_region
      %s419 = ssub.s32 384, 384
      %420 = vsyncadd [#allocation4], %s419
      %s421 = sshll.u32 [#allocation12], 4
      %s422 = int_to_ptr.vmem [resolvable:$true] %s421
      %427 = dma.vmem_to_hbm [thread:$0]  %s422, 384, %s5, [#allocation4], 128, 128, 8
    $region45: #{tpu_custom_call.1} parent=1 // pred_fallthru
      _
    // Predicated region
    $region46: #{tpu_custom_call.1} parent=1 // pred_check
      _
    $region47: #{tpu_custom_call.1} parent=1 // pred_check_branch
      %429 = sbr.rel (0) target = $region49
    $region48: #{tpu_custom_call.1} parent=1 // pred_region
      %430 = dma.done [#allocation4], 384
    $region49: #{tpu_custom_call.1} parent=1 // pred_fallthru
      _
    %431 = vsyncpa [#allocation3], 1
    %432 = vsyncpa [#allocation4], 1
    %433 = vsyncpa [#allocation5], 1
    %434 = vsyncpa [#allocation8], 1
    %435 = vsyncpa [#allocation11], 1

</llo_original>
